<compile_context>
chip_gen: v6e
topology: v6e:2x2x1
jax: 0.10.0
libtpu: 0.0.40
codegen_flags: <defaults>
</compile_context>

<pallas_src>
import math
from functools import partial

import jax
import jax.numpy as jnp
from jax.experimental import pallas as pl
from jax.experimental.pallas import tpu as pltpu


# ---------------------------------------------------------------------------
# Layout selection: lane-dense (rows, lanes) slab, ~2 MiB blocks, padded rows.
# Per-step block footprint: 4 arrays x 2 buffers x 2 MiB = 16 MiB.
# Multi-step footprint: ~9 x 2 MiB = 18 MiB.  Both fit the 48 MiB scoped-VMEM
# budget requested below on v5e/v6e/v7x.
# ---------------------------------------------------------------------------
def _choose_layout(n_elem, itemsize=4, target_block_bytes=2 << 20):
    lanes = 512 if n_elem >= 4096 else 128              # wide, unmasked vst
    sublane = max(8, 32 // int(itemsize))               # 8 f32 / 16 bf16 / 32 i8
    rows = -(-n_elem // lanes)
    rows = -(-rows // sublane) * sublane                # sublane-aligned
    target_rows = max(sublane, (target_block_bytes // itemsize) // lanes)
    target_rows = max(sublane, (target_rows // sublane) * sublane)
    tile_rows = min(target_rows, rows)
    rows_padded = -(-rows // tile_rows) * tile_rows
    return lanes, tile_rows, rows_padded


# ---------------------------------------------------------------------------
# Kernels
# ---------------------------------------------------------------------------
def _if_step_kernel(dv_ref, v_ref, spike_ref, v_next_ref, *, v_threshold,
                    v_reset):
    h = v_ref[...] + dv_ref[...]
    fired = h >= jnp.asarray(v_threshold, h.dtype)
    spike_ref[...] = fired.astype(spike_ref.dtype)
    v_next_ref[...] = jnp.where(fired, jnp.asarray(v_reset, h.dtype), h)


def _if_multi_step_kernel(dv_ref, v_in_ref, spike_ref, v_out_ref, v_carry,
                          *, v_threshold, v_reset):
    t = pl.program_id(1)

    @pl.when(t == 0)
    def _():
        v_carry[...] = v_in_ref[...]          # load state once per row-block

    h = v_carry[...] + dv_ref[...]
    fired = h >= jnp.asarray(v_threshold, h.dtype)
    spike_ref[...] = fired.astype(spike_ref.dtype)
    v_carry[...] = jnp.where(fired, jnp.asarray(v_reset, h.dtype), h)

    @pl.when(t == pl.num_programs(1) - 1)
    def _():
        v_out_ref[...] = v_carry[...]         # write state back once at the end


# ---------------------------------------------------------------------------
# jit-ed wrappers
# ---------------------------------------------------------------------------
@partial(jax.jit,
         static_argnames=("v_threshold", "v_reset", "lanes", "tile_rows",
                          "rows_padded"),
         donate_argnames=("v_2d",))
def _if_hard_reset_step(dv, v_2d, *, v_threshold, v_reset, lanes, tile_rows,
                        rows_padded):
    orig_shape = dv.shape
    n_elem = math.prod(orig_shape)
    total = rows_padded * lanes
    flat = dv.reshape(-1)
    if total != n_elem:                       # rare: only for ragged sizes
        flat = jnp.pad(flat, (0, total - n_elem))
    dv_2d = flat.reshape(rows_padded, lanes)

    block = pl.BlockSpec((tile_rows, lanes), lambda i: (i, 0))
    kernel = partial(_if_step_kernel, v_threshold=v_threshold, v_reset=v_reset)

    spike_2d, v_next_2d = pl.pallas_call(
        kernel,
        out_shape=(jax.ShapeDtypeStruct((rows_padded, lanes), dv.dtype),
                   jax.ShapeDtypeStruct((rows_padded, lanes), dv.dtype)),
        grid_spec=pltpu.PrefetchScalarGridSpec(
            num_scalar_prefetch=0,
            grid=(rows_padded // tile_rows,),
            in_specs=[block, block],
            out_specs=[block, block],
        ),
        compiler_params=pltpu.CompilerParams(
            dimension_semantics=("parallel",),
            vmem_limit_bytes=48 << 20),
        input_output_aliases={1: 1},          # v  ->  v_next (in-place update)
    )(dv_2d, v_2d)

    spike = spike_2d.reshape(-1)[:n_elem].reshape(orig_shape)
    return spike, v_next_2d


@partial(jax.jit,
         static_argnames=("v_threshold", "v_reset", "lanes", "tile_rows",
                          "rows_padded"),
         donate_argnames=("v_2d",))
def _if_hard_reset_multi_step(dv_seq, v_2d, *, v_threshold, v_reset, lanes,
                              tile_rows, rows_padded):
    T = dv_seq.shape[0]
    step_shape = dv_seq.shape[1:]
    n_elem = math.prod(step_shape)
    total = rows_padded * lanes
    flat = dv_seq.reshape(T, -1)
    if total != n_elem:                       # rare: only for ragged sizes
        flat = jnp.pad(flat, ((0, 0), (0, total - n_elem)))
    dv_3d = flat.reshape(T, rows_padded, lanes)

    kernel = partial(_if_multi_step_kernel, v_threshold=v_threshold,
                     v_reset=v_reset)

    spike_3d, v_next_2d = pl.pallas_call(
        kernel,
        out_shape=(jax.ShapeDtypeStruct((T, rows_padded, lanes), dv_seq.dtype),
                   jax.ShapeDtypeStruct((rows_padded, lanes), dv_seq.dtype)),
        grid_spec=pltpu.PrefetchScalarGridSpec(
            num_scalar_prefetch=0,
            grid=(rows_padded // tile_rows, T),   # time axis last ("arbitrary")
            in_specs=[
                pl.BlockSpec((None, tile_rows, lanes), lambda r, t: (t, r, 0)),
                pl.BlockSpec((tile_rows, lanes), lambda r, t: (r, 0)),
            ],
            out_specs=[
                pl.BlockSpec((None, tile_rows, lanes), lambda r, t: (t, r, 0)),
                pl.BlockSpec((tile_rows, lanes), lambda r, t: (r, 0)),
            ],
            scratch_shapes=[pltpu.VMEM((tile_rows, lanes), dv_seq.dtype)],
        ),
        compiler_params=pltpu.CompilerParams(
            dimension_semantics=("parallel", "arbitrary"),
            vmem_limit_bytes=48 << 20),
        input_output_aliases={1: 1},          # v  ->  v_next (in-place update)
    )(dv_3d, v_2d)

    spikes = spike_3d.reshape(T, -1)[:, :n_elem].reshape((T,) + tuple(step_shape))
    return spikes, v_next_2d


# ---------------------------------------------------------------------------
# Module
# ---------------------------------------------------------------------------
class IFNode:
    """JAX/Pallas port of spikingjelly.cext.neuron.IFNode (inference forward).

    # TODO(synk): backward surrogate gradients (ATan/Sigmoid, alpha,
    # detach_reset) are training-only (IFStep.backward) and not implemented.
    """

    def __init__(self, v_threshold=1.0, v_reset=0.0, surrogate_function='ATan',
                 alpha=2.0, detach_reset=False):
        if v_reset is None:
            raise NotImplementedError
        if surrogate_function not in ('ATan', 'Sigmoid'):
            raise ValueError(f'unknown surrogate_function {surrogate_function}')
        self.v_threshold = float(v_threshold)
        self.v_reset = float(v_reset)
        self.surrogate_function = surrogate_function
        self.alpha = alpha
        self.detach_reset = detach_reset
        self.reset()

    def reset(self):
        self.v = self.v_reset          # scalar sentinel, like the PyTorch module
        self._shape = None
        self._layout = None

    # -- state handling -----------------------------------------------------
    def _init_state(self, step_shape, dtype):
        step_shape = tuple(step_shape)
        if self._shape is None:
            n_elem = math.prod(step_shape)
            self._shape = step_shape
            self._layout = _choose_layout(n_elem, jnp.dtype(dtype).itemsize)
            lanes, _, rows_padded = self._layout
            self.v = jnp.full((rows_padded, lanes), self.v_reset, dtype)
        elif self._shape != step_shape:
            raise ValueError(
                f'input shape changed from {self._shape} to {step_shape}; '
                'call reset() first')

    def membrane(self):
        """Membrane potential v in the original input shape."""
        if self._shape is None:
            return self.v
        n_elem = math.prod(self._shape)
        return self.v.reshape(-1)[:n_elem].reshape(self._shape)

    # -- forward ------------------------------------------------------------
    def __call__(self, dv):
        self._init_state(dv.shape, dv.dtype)
        lanes, tile_rows, rows_padded = self._layout
        spike, self.v = _if_hard_reset_step(
            dv, self.v, v_threshold=self.v_threshold, v_reset=self.v_reset,
            lanes=lanes, tile_rows=tile_rows, rows_padded=rows_padded)
        return spike

    forward = __call__

    def multi_step_forward(self, dv_seq):
        """Fused forward over dv_seq of shape (T, *step_shape) in one pallas_call."""
        self._init_state(dv_seq.shape[1:], dv_seq.dtype)
        lanes, tile_rows, rows_padded = self._layout
        spikes, self.v = _if_hard_reset_multi_step(
            dv_seq, self.v, v_threshold=self.v_threshold, v_reset=self.v_reset,
            lanes=lanes, tile_rows=tile_rows, rows_padded=rows_padded)
        return spikes


# ---------------------------------------------------------------------------
# Pure-JAX reference and self-test
# ---------------------------------------------------------------------------
def _reference_if_sequence(dv_seq, v_threshold, v_reset):
    v = jnp.full_like(dv_seq[0], v_reset)
    spikes = []
    for t in range(dv_seq.shape[0]):
        h = v + dv_seq[t]
        fired = h >= v_threshold
        spikes.append(fired.astype(dv_seq.dtype))
        v = jnp.where(fired, v_reset, h)
    return jnp.stack(spikes), v


if __name__ == "__main__":
    key = jax.random.PRNGKey(0)
    T, N, C, H, W = 4, 2, 4, 16, 16          # small NCHW sequence
    dv_seq = jax.random.normal(key, (T, N, C, H, W), dtype=jnp.float32)

    # Per-step API (matches the PyTorch module: one forward per timestep).
    node = IFNode(v_threshold=1.0, v_reset=0.0)
    spikes_step = jnp.stack([node(dv_seq[t]) for t in range(T)])
    jax.block_until_ready(spikes_step)

    # Fused multi-step API: all T timesteps in a single pallas_call.
    node_fused = IFNode(v_threshold=1.0, v_reset=0.0)
    spikes_fused = node_fused.multi_step_forward(dv_seq)
    jax.block_until_ready(spikes_fused)

    # Pure-JAX reference over all timesteps.
    ref_spikes, ref_v = _reference_if_sequence(dv_seq, 1.0, 0.0)

    assert jnp.array_equal(spikes_step, ref_spikes), "per-step spike mismatch"
    assert jnp.array_equal(spikes_fused, ref_spikes), "fused spike mismatch"
    assert jnp.allclose(node.membrane(), ref_v), "per-step membrane mismatch"
    assert jnp.allclose(node_fused.membrane(), ref_v), "fused membrane mismatch"

    print("KERNEL_OK")
</pallas_src>

<mosaic_0001>
module attributes {stable_mosaic.version = 11 : i64} {
  func.func @_if_step_kernel(%arg0: i32, %arg1: memref<16x128xf32, #tpu.memory_space<vmem>>, %arg2: memref<16x128xf32, #tpu.memory_space<vmem>>, %arg3: memref<16x128xf32, #tpu.memory_space<vmem>>, %arg4: memref<16x128xf32, #tpu.memory_space<vmem>>) attributes {dimension_semantics = [#tpu.dimension_semantics<parallel>], iteration_bounds = array<i64: 1>, scalar_prefetch = 0 : i64, scratch_operands = 0 : i64, tpu.core_type = #tpu.core_type<tc>, window_params = [{transform_indices = @transform_0, window_bounds = array<i64: 16, 128>}, {transform_indices = @transform_1, window_bounds = array<i64: 16, 128>}, {transform_indices = @transform_2, window_bounds = array<i64: 16, 128>}, {transform_indices = @transform_3, window_bounds = array<i64: 16, 128>}]} {
    %c0 = arith.constant 0 : index
    %c0_0 = arith.constant 0 : index
    %0 = vector.load %arg2[%c0, %c0_0] : memref<16x128xf32, #tpu.memory_space<vmem>>, vector<16x128xf32>
    %c0_1 = arith.constant 0 : index
    %c0_2 = arith.constant 0 : index
    %1 = vector.load %arg1[%c0_1, %c0_2] : memref<16x128xf32, #tpu.memory_space<vmem>>, vector<16x128xf32>
    %2 = arith.addf %0, %1 : vector<16x128xf32>
    %cst = arith.constant 1.000000e+00 : f32
    %3 = vector.broadcast %cst : f32 to vector<16x128xf32>
    %4 = arith.cmpf oge, %2, %3 : vector<16x128xf32>
    %5 = arith.extui %4 : vector<16x128xi1> to vector<16x128xi32>
    %6 = arith.sitofp %5 : vector<16x128xi32> to vector<16x128xf32>
    %c0_3 = arith.constant 0 : index
    %c0_4 = arith.constant 0 : index
    %7 = vector.load %arg3[%c0_3, %c0_4] : memref<16x128xf32, #tpu.memory_space<vmem>>, vector<16x128xf32>
    tpu.vector_store %arg3[%c0_3, %c0_4], %6 {strides = array<i32>} : memref<16x128xf32, #tpu.memory_space<vmem>>, vector<16x128xf32>,
    %cst_5 = arith.constant 0.000000e+00 : f32
    %8 = vector.broadcast %cst_5 : f32 to vector<16x128xf32>
    %9 = arith.select %4, %8, %2 : vector<16x128xi1>, vector<16x128xf32>
    %c0_6 = arith.constant 0 : index
    %c0_7 = arith.constant 0 : index
    %10 = vector.load %arg4[%c0_6, %c0_7] : memref<16x128xf32, #tpu.memory_space<vmem>>, vector<16x128xf32>
    tpu.vector_store %arg4[%c0_6, %c0_7], %9 {strides = array<i32>} : memref<16x128xf32, #tpu.memory_space<vmem>>, vector<16x128xf32>,
    return
  }
  func.func @transform_0(%arg0: i32) -> (i32, i32) {
    %c0_i32 = arith.constant 0 : i32
    %c0_i32_0 = arith.constant 0 : i32
    return %arg0, %c0_i32 : i32, i32
  }
  func.func @transform_1(%arg0: i32) -> (i32, i32) {
    %c0_i32 = arith.constant 0 : i32
    %c0_i32_0 = arith.constant 0 : i32
    return %arg0, %c0_i32 : i32, i32
  }
  func.func @transform_2(%arg0: i32) -> (i32, i32) {
    %c0_i32 = arith.constant 0 : i32
    %c0_i32_0 = arith.constant 0 : i32
    return %arg0, %c0_i32 : i32, i32
  }
  func.func @transform_3(%arg0: i32) -> (i32, i32) {
    %c0_i32 = arith.constant 0 : i32
    %c0_i32_0 = arith.constant 0 : i32
    return %arg0, %c0_i32 : i32, i32
  }
}

</mosaic_0001>

<llo_original>
// kernel: _if_hard_reset_step.1
$region0: #{_if_hard_reset_step.1}
  #allocation0 [shape = 'u32[]', space=smem, size = 0x4, offset = 0x4, fixed_abs, tag = 'smem constant byte address 0x4 - core index']
  #allocation1 [shape = 'u32[144,128]{1,0:T(1,128)}', space=vmem, size = 0x12000, scoped, tag = 'internal scratch']
  %s0 = inlined_call_operand.vmem [shape: f32[16,128], index: 0, kind: input, shape index: {}]
  %s1 = inlined_call_operand.vmem [shape: f32[16,128], index: 1, kind: input, shape index: {}, may-alias: {1,3}]
  %s2 = inlined_call_operand.vmem [shape: f32[16,128], index: 2, kind: output, shape index: {0}]
  %s3 = inlined_call_operand.vmem [shape: f32[16,128], index: 3, kind: output, shape index: {1}, may-alias: {1,3}]
  %4 = xla_tuple %s2, %s3
  %s5 = sld [smem:[#allocation0]]
  $region26: #{_if_hard_reset_step.1} parent=0
    _
  %s7 = ssub.s32 1, %s5
  %s8 = scalar_select 0, %s7, %s5
  // Predicated region
  $region2: #{_if_hard_reset_step.1} parent=0 // pred_check
    _
  $region3: #{_if_hard_reset_step.1} parent=0 // pred_check_branch
    %10 = sbr.rel (0) target = $region5
  $region4: #{_if_hard_reset_step.1} parent=0 // pred_region
    _
  $region5: #{_if_hard_reset_step.1} parent=0 // pred_fallthru
    _
  // Predicated region
  $region6: #{_if_hard_reset_step.1} parent=0 // pred_check
    _
  $region7: #{_if_hard_reset_step.1} parent=0 // pred_check_branch
    %12 = sbr.rel (0) target = $region9
  $region8: #{_if_hard_reset_step.1} parent=0 // pred_region
    _
  $region9: #{_if_hard_reset_step.1} parent=0 // pred_fallthru
    _
  %v13 = vld [vmem:[%s1] sm:$0xff]
  %v14 = vld [vmem:[%s1 + $0x8] sm:$0xff]
  %v15 = vld [vmem:[%s0] sm:$0xff]
  %v16 = vld [vmem:[%s0 + $0x8] sm:$0xff]
  %v17 = vadd.f32 %v13, %v15
  %v18 = vadd.f32 %v14, %v16
  %vm19 = vcmp.ge.f32.partialorder %v17, 1.0
  %vm20 = vcmp.ge.f32.partialorder %v18, 1.0
  %v21 = vsel %vm19, 1, 0
  %v22 = vsel %vm20, 1, 0
  %v23 = vcvt.s32.f32 %v21
  %v24 = vcvt.s32.f32 %v22
  %25 = vst [vmem:[%s2] sm:$0xff] %v23
  %26 = vst [vmem:[%s2 + $0x8] sm:$0xff] %v24
  %v27 = vsel %vm19, 0.0, %v17
  %v28 = vsel %vm20, 0.0, %v18
  %29 = vst [vmem:[%s3] sm:$0xff] %v27
  %30 = vst [vmem:[%s3 + $0x8] sm:$0xff] %v28
  // Predicated region
  $region10: #{_if_hard_reset_step.1} parent=0 // pred_check
    _
  $region11: #{_if_hard_reset_step.1} parent=0 // pred_check_branch
    %32 = sbr.rel (0) target = $region13
  $region12: #{_if_hard_reset_step.1} parent=0 // pred_region
    _
  $region13: #{_if_hard_reset_step.1} parent=0 // pred_fallthru
    _
  // Predicated region
  $region14: #{_if_hard_reset_step.1} parent=0 // pred_check
    _
  $region15: #{_if_hard_reset_step.1} parent=0 // pred_check_branch
    %34 = sbr.rel (0) target = $region17
  $region16: #{_if_hard_reset_step.1} parent=0 // pred_region
    _
  $region17: #{_if_hard_reset_step.1} parent=0 // pred_fallthru
    _
  // Predicated region
  $region18: #{_if_hard_reset_step.1} parent=0 // pred_check
    _
  $region19: #{_if_hard_reset_step.1} parent=0 // pred_check_branch
    %36 = sbr.rel (0) target = $region21
  $region20: #{_if_hard_reset_step.1} parent=0 // pred_region
    _
  $region21: #{_if_hard_reset_step.1} parent=0 // pred_fallthru
    _
  // Predicated region
  $region22: #{_if_hard_reset_step.1} parent=0 // pred_check
    _
  $region23: #{_if_hard_reset_step.1} parent=0 // pred_check_branch
    %38 = sbr.rel (0) target = $region25
  $region24: #{_if_hard_reset_step.1} parent=0 // pred_region
    _
  $region25: #{_if_hard_reset_step.1} parent=0 // pred_fallthru
    _

</llo_original>
